<compile_context>
chip_gen: v7x
topology: tpu7x:2x2x1
jax: 0.10.0
libtpu: 0.0.40
codegen_flags: <defaults>
</compile_context>

<pallas_src>
import jax
import jax.numpy as jnp
from jax import lax
from jax.experimental import pallas as pl
from jax.experimental.pallas import tpu as pltpu

D_OUT = 10                     # depth extent after f0 == kernel depth of f6
D_IN, HW = 16, 49              # input depth, 7*7 spatial
C0, C2, C3, C4, C6 = 13, 25, 64, 28, 10
K0 = D_IN * HW                 # 784
N0 = D_OUT * C0                # 130
N1 = D_OUT * C4                # 280
OUT_W = 128                    # lane-dense output width (first 10 lanes valid)


def _round_up(x, m):
    return -(-x // m) * m


def _kernel(x_ref, w0_ref, b0_ref, w234_ref, b234_ref, w6_ref, out_ref):
    # x: (tile_b, 784) bf16
    x = x_ref[...]
    # f0 (7x7x7 conv as Toeplitz matmul) + bias, f1 tanh         -> (tile_b, 130)
    h = jnp.dot(x, w0_ref[...], preferred_element_type=jnp.float32) + b0_ref[...]
    h = jnp.tanh(h).astype(jnp.bfloat16)
    # f2*f3*f4 fused into one block-diagonal matrix (+ fused bias), f5 tanh -> (tile_b, 280)
    h = jnp.dot(h, w234_ref[...], preferred_element_type=jnp.float32) + b234_ref[...]
    h = jnp.tanh(h).astype(jnp.bfloat16)
    # f6: (10,1,1) conv == single K=280 contraction, zero-padded to 128 lanes
    lg = jnp.dot(h, w6_ref[...], preferred_element_type=jnp.float32)   # (tile_b, 128)
    # f7: log-softmax over the 10 valid lanes
    lane = lax.broadcasted_iota(jnp.int32, lg.shape, 1)
    valid = lane < C6
    lg = jnp.where(valid, lg, -jnp.inf)
    m = jnp.max(lg, axis=-1, keepdims=True)
    z = lg - m
    s = jnp.sum(jnp.where(valid, jnp.exp(z), 0.0), axis=-1, keepdims=True)
    logp = z - jnp.log(s)
    out_ref[...] = jnp.where(valid, logp, 0.0)


def prepare_params(params):
    """One-time weight preprocessing (hoisted out of the per-call path)."""
    W0, b0, W2, b2, W3, W4, W6 = [jnp.asarray(p, jnp.float32) for p in params]

    # f0 -> Toeplitz-unfolded weight (784, 130); column j = d*13 + c (depth-major).
    W0m = jnp.transpose(W0.reshape(C0, 7, HW), (1, 2, 0))            # (kd, kh*kw, c)
    W0u = jnp.zeros((D_IN, HW, D_OUT, C0), jnp.float32)
    for d in range(D_OUT):
        W0u = W0u.at[d:d + 7, :, d, :].set(W0m)
    W0u = W0u.reshape(K0, N0)                                        # (784, 130)
    b0u = jnp.tile(b0, D_OUT).reshape(1, N0)                         # (1, 130) f32

    # f2,f3,f4 are purely linear -> fuse per-depth, then block-diagonal over depth.
    W2t = W2.reshape(C2, C0).T                                       # (13, 25)
    W3t = W3.reshape(C3, C2).T                                       # (25, 64)
    W4t = W4.reshape(C4, C3).T                                       # (64, 28)
    W234 = W2t @ W3t @ W4t                                           # (13, 28)
    b234 = b2 @ W3t @ W4t                                            # (28,)
    eye = jnp.eye(D_OUT, dtype=jnp.float32)
    W234bd = jnp.kron(eye, W234)                                     # (130, 280)
    b234u = jnp.tile(b234, D_OUT).reshape(1, N1)                     # (1, 280) f32

    # f6: logits[b,o] = sum_{d,c4} h[b, d*28+c4] * W6[o, c4, d]; pad to 128 lanes.
    W6u = jnp.transpose(W6.reshape(C6, C4, D_OUT), (2, 1, 0)).reshape(N1, C6)
    W6u = jnp.pad(W6u, ((0, 0), (0, OUT_W - C6)))                    # (280, 128)

    # bf16 MXU operands (accumulation stays f32 in-kernel); biases stay f32.
    return (W0u.astype(jnp.bfloat16), b0u,
            W234bd.astype(jnp.bfloat16), b234u,
            W6u.astype(jnp.bfloat16))


def _choose_tiling(B):
    """tile_b, padded batch.  Small B: one tile.  Large B: even count of 256-multiple
    tiles so v7x's two TensorCores split the 'parallel' grid axis evenly."""
    if B <= 512:
        t = _round_up(max(B, 1), 16)
        return t, t
    n_tiles = max(2, 2 * ((B + 1023) // 1024))        # even number of tiles
    tile_b = _round_up(-(-B // n_tiles), 256)         # 256-row multiples
    return tile_b, tile_b * n_tiles


def conv3dtanh_20_forward(x, prepped):
    W0u, b0u, W234bd, b234u, W6u = prepped
    B = x.shape[0]
    xf = x.reshape(B, K0).astype(jnp.bfloat16)

    tile_b, Bp = _choose_tiling(B)
    if Bp != B:
        xf = jnp.pad(xf, ((0, Bp - B), (0, 0)))
    grid = (Bp // tile_b,)

    const = lambda i: (0, 0)
    cost = pl.CostEstimate(
        flops=2 * Bp * (K0 * N0 + N0 * N1 + N1 * OUT_W),
        transcendentals=Bp * (N0 + N1 + C6),
        bytes_accessed=(Bp * K0 * 2 + Bp * OUT_W * 4
                        + W0u.size * 2 + W234bd.size * 2 + W6u.size * 2
                        + b0u.size * 4 + b234u.size * 4),
    )

    out = pl.pallas_call(
        _kernel,
        out_shape=jax.ShapeDtypeStruct((Bp, OUT_W), jnp.float32),
        grid_spec=pltpu.PrefetchScalarGridSpec(
            num_scalar_prefetch=0,
            grid=grid,
            in_specs=[
                pl.BlockSpec((tile_b, K0), lambda i: (i, 0)),   # input batch tile (bf16)
                pl.BlockSpec(W0u.shape, const),
                pl.BlockSpec(b0u.shape, const),
                pl.BlockSpec(W234bd.shape, const),
                pl.BlockSpec(b234u.shape, const),
                pl.BlockSpec(W6u.shape, const),
            ],
            out_specs=pl.BlockSpec((tile_b, OUT_W), lambda i: (i, 0)),
        ),
        compiler_params=pltpu.CompilerParams(
            dimension_semantics=("parallel",),                  # batch tiles split across TCs
        ),
        cost_estimate=cost,
    )(xf, W0u, b0u, W234bd, b234u, W6u)
    return out[:B, :C6]


def ref_forward(x, params):
    """Pure-JAX reference (XLA 3-D convs, f32), mirrors the PyTorch forward exactly."""
    W0, b0, W2, b2, W3, W4, W6 = params
    B = x.shape[0]
    dn = ("NCDHW", "OIDHW", "NCDHW")
    y = x.reshape(B, 1, D_IN, 7, 7).astype(jnp.float32)
    y = lax.conv_general_dilated(y, W0, (1, 1, 1), "VALID", dimension_numbers=dn)
    y = y + b0.reshape(1, -1, 1, 1, 1)
    y = jnp.tanh(y)
    y = lax.conv_general_dilated(y, W2, (1, 1, 1), "VALID", dimension_numbers=dn)
    y = y + b2.reshape(1, -1, 1, 1, 1)
    y = lax.conv_general_dilated(y, W3, (1, 1, 1), "VALID", dimension_numbers=dn)
    y = lax.conv_general_dilated(y, W4, (1, 1, 1), "VALID", dimension_numbers=dn)
    y = jnp.tanh(y)
    y = lax.conv_general_dilated(y, W6, (1, 1, 1), "VALID", dimension_numbers=dn)
    y = y.reshape(B, C6)
    return jax.nn.log_softmax(y, axis=1)


if __name__ == "__main__":
    key = jax.random.PRNGKey(0)
    ks = jax.random.split(key, 8)
    B = 2
    x = jax.random.normal(ks[0], (B, 784), dtype=jnp.float32)

    def u(k, shape, fan_in):
        bound = 1.0 / (fan_in ** 0.5)
        return jax.random.uniform(k, shape, jnp.float32, -bound, bound)

    # deterministic synthetic parameters, PyTorch Conv3d shapes / fan-in scaling
    W0 = u(ks[1], (13, 1, 7, 7, 7), 1 * 7 * 7 * 7)
    b0 = u(ks[2], (13,), 1 * 7 * 7 * 7)
    W2 = u(ks[3], (25, 13, 1, 1, 1), 13)
    b2 = u(ks[4], (25,), 13)
    W3 = u(ks[5], (64, 25, 1, 1, 1), 25)
    W4 = u(ks[6], (28, 64, 1, 1, 1), 64)
    W6 = u(ks[7], (10, 28, 10, 1, 1), 28 * 10)
    params = (W0, b0, W2, b2, W3, W4, W6)

    prepped = prepare_params(params)          # one-time weight unfold / fusion / bf16 cast

    out = jax.block_until_ready(conv3dtanh_20_forward(x, prepped))
    ref = jax.block_until_ready(ref_forward(x, params))

    assert out.shape == (B, 10)
    # bf16 MXU operands with f32 accumulation -> relaxed-but-tight tolerance vs f32 ref
    assert bool(jnp.allclose(out, ref, atol=2e-2, rtol=2e-2)), (out, ref)
    print("KERNEL_OK")
</pallas_src>

<mosaic_0001>
module attributes {stable_mosaic.version = 11 : i64} {
  func.func @_kernel(%arg0: i32, %arg1: memref<16x784xbf16, #tpu.memory_space<vmem>>, %arg2: memref<784x130xbf16, #tpu.memory_space<vmem>>, %arg3: memref<1x130xf32, #tpu.memory_space<vmem>>, %arg4: memref<130x280xbf16, #tpu.memory_space<vmem>>, %arg5: memref<1x280xf32, #tpu.memory_space<vmem>>, %arg6: memref<280x128xbf16, #tpu.memory_space<vmem>>, %arg7: memref<16x128xf32, #tpu.memory_space<vmem>>) attributes {dimension_semantics = [#tpu.dimension_semantics<parallel>], iteration_bounds = array<i64: 1>, scalar_prefetch = 0 : i64, scratch_operands = 0 : i64, tpu.core_type = #tpu.core_type<tc>, window_params = [{transform_indices = @transform_0, window_bounds = array<i64: 16, 784>}, {pipeline_mode = #tpu.pipeline_mode<synchronous>, transform_indices = @transform_1, window_bounds = array<i64: 784, 130>}, {pipeline_mode = #tpu.pipeline_mode<synchronous>, transform_indices = @transform_2, window_bounds = array<i64: 1, 130>}, {pipeline_mode = #tpu.pipeline_mode<synchronous>, transform_indices = @transform_3, window_bounds = array<i64: 130, 280>}, {pipeline_mode = #tpu.pipeline_mode<synchronous>, transform_indices = @transform_4, window_bounds = array<i64: 1, 280>}, {pipeline_mode = #tpu.pipeline_mode<synchronous>, transform_indices = @transform_5, window_bounds = array<i64: 280, 128>}, {transform_indices = @transform_6, window_bounds = array<i64: 16, 128>}]} {
    %c0 = arith.constant 0 : index
    %c0_0 = arith.constant 0 : index
    %0 = vector.load %arg1[%c0, %c0_0] : memref<16x784xbf16, #tpu.memory_space<vmem>>, vector<16x784xbf16>
    %c0_1 = arith.constant 0 : index
    %c0_2 = arith.constant 0 : index
    %1 = vector.load %arg2[%c0_1, %c0_2] : memref<784x130xbf16, #tpu.memory_space<vmem>>, vector<784x130xbf16>
    %cst = arith.constant dense<0.000000e+00> : vector<16x130xf32>
    %2 = tpu.matmul %0, %1, %cst {dimension_numbers = #tpu.dot_dimension_numbers<[1], [0], [0], [1], [0, 0, 1, 1], [], []>} : vector<16x784xbf16>, vector<784x130xbf16>, vector<16x130xf32> -> vector<16x130xf32>
    %c0_3 = arith.constant 0 : index
    %c0_4 = arith.constant 0 : index
    %3 = vector.load %arg3[%c0_3, %c0_4] : memref<1x130xf32, #tpu.memory_space<vmem>>, vector<1x130xf32>
    %4 = vector.broadcast %3 : vector<1x130xf32> to vector<16x130xf32>
    %5 = arith.addf %2, %4 : vector<16x130xf32>
    %6 = math.tanh %5 : vector<16x130xf32>
    %7 = arith.truncf %6 : vector<16x130xf32> to vector<16x130xbf16>
    %c0_5 = arith.constant 0 : index
    %c0_6 = arith.constant 0 : index
    %8 = vector.load %arg4[%c0_5, %c0_6] : memref<130x280xbf16, #tpu.memory_space<vmem>>, vector<130x280xbf16>
    %cst_7 = arith.constant dense<0.000000e+00> : vector<16x280xf32>
    %9 = tpu.matmul %7, %8, %cst_7 {dimension_numbers = #tpu.dot_dimension_numbers<[1], [0], [0], [1], [0, 0, 1, 1], [], []>} : vector<16x130xbf16>, vector<130x280xbf16>, vector<16x280xf32> -> vector<16x280xf32>
    %c0_8 = arith.constant 0 : index
    %c0_9 = arith.constant 0 : index
    %10 = vector.load %arg5[%c0_8, %c0_9] : memref<1x280xf32, #tpu.memory_space<vmem>>, vector<1x280xf32>
    %11 = vector.broadcast %10 : vector<1x280xf32> to vector<16x280xf32>
    %12 = arith.addf %9, %11 : vector<16x280xf32>
    %13 = math.tanh %12 : vector<16x280xf32>
    %14 = arith.truncf %13 : vector<16x280xf32> to vector<16x280xbf16>
    %c0_10 = arith.constant 0 : index
    %c0_11 = arith.constant 0 : index
    %15 = vector.load %arg6[%c0_10, %c0_11] : memref<280x128xbf16, #tpu.memory_space<vmem>>, vector<280x128xbf16>
    %cst_12 = arith.constant dense<0.000000e+00> : vector<16x128xf32>
    %16 = tpu.matmul %14, %15, %cst_12 {dimension_numbers = #tpu.dot_dimension_numbers<[1], [0], [0], [1], [0, 0, 1, 1], [], []>} : vector<16x280xbf16>, vector<280x128xbf16>, vector<16x128xf32> -> vector<16x128xf32>
    %17 = tpu.iota {dimensions = array<i32: 1>} : vector<16x128xi32>
    %c10_i32 = arith.constant 10 : i32
    %18 = vector.broadcast %c10_i32 : i32 to vector<16x128xi32>
    %19 = arith.cmpi slt, %17, %18 : vector<16x128xi32>
    %cst_13 = arith.constant 0xFF800000 : f32
    %20 = vector.broadcast %cst_13 : f32 to vector<16x128xf32>
    %21 = arith.select %19, %16, %20 : vector<16x128xi1>, vector<16x128xf32>
    %cst_14 = arith.constant dense<0xFF800000> : vector<16xf32>
    %22 = vector.multi_reduction <maximumf>, %21, %cst_14 [1] : vector<16x128xf32> to vector<16xf32>
    %23 = vector.shape_cast %22 : vector<16xf32> to vector<16x1xf32>
    %24 = vector.broadcast %23 : vector<16x1xf32> to vector<16x128xf32>
    %25 = arith.subf %21, %24 : vector<16x128xf32>
    %26 = math.exp %25 : vector<16x128xf32>
    %cst_15 = arith.constant 0.000000e+00 : f32
    %27 = vector.broadcast %cst_15 : f32 to vector<16x128xf32>
    %28 = arith.select %19, %26, %27 : vector<16x128xi1>, vector<16x128xf32>
    %cst_16 = arith.constant dense<0.000000e+00> : vector<16xf32>
    %29 = vector.multi_reduction <add>, %28, %cst_16 [1] : vector<16x128xf32> to vector<16xf32>
    %30 = vector.shape_cast %29 : vector<16xf32> to vector<16x1xf32>
    %31 = math.log %30 : vector<16x1xf32>
    %32 = vector.broadcast %31 : vector<16x1xf32> to vector<16x128xf32>
    %33 = arith.subf %25, %32 : vector<16x128xf32>
    %cst_17 = arith.constant 0.000000e+00 : f32
    %34 = vector.broadcast %cst_17 : f32 to vector<16x128xf32>
    %35 = arith.select %19, %33, %34 : vector<16x128xi1>, vector<16x128xf32>
    %c0_18 = arith.constant 0 : index
    %c0_19 = arith.constant 0 : index
    %36 = vector.load %arg7[%c0_18, %c0_19] : memref<16x128xf32, #tpu.memory_space<vmem>>, vector<16x128xf32>
    tpu.vector_store %arg7[%c0_18, %c0_19], %35 {strides = array<i32>} : memref<16x128xf32, #tpu.memory_space<vmem>>, vector<16x128xf32>,
    return
  }
  func.func @transform_0(%arg0: i32) -> (i32, i32) {
    %c0_i32 = arith.constant 0 : i32
    %c0_i32_0 = arith.constant 0 : i32
    return %arg0, %c0_i32 : i32, i32
  }
  func.func @transform_1(%arg0: i32) -> (i32, i32) {
    %c0_i32 = arith.constant 0 : i32
    %c0_i32_0 = arith.constant 0 : i32
    %c0_i32_1 = arith.constant 0 : i32
    return %c0_i32, %c0_i32_0 : i32, i32
  }
  func.func @transform_2(%arg0: i32) -> (i32, i32) {
    %c0_i32 = arith.constant 0 : i32
    %c0_i32_0 = arith.constant 0 : i32
    %c0_i32_1 = arith.constant 0 : i32
    return %c0_i32, %c0_i32_0 : i32, i32
  }
  func.func @transform_3(%arg0: i32) -> (i32, i32) {
    %c0_i32 = arith.constant 0 : i32
    %c0_i32_0 = arith.constant 0 : i32
    %c0_i32_1 = arith.constant 0 : i32
    return %c0_i32, %c0_i32_0 : i32, i32
  }
  func.func @transform_4(%arg0: i32) -> (i32, i32) {
    %c0_i32 = arith.constant 0 : i32
    %c0_i32_0 = arith.constant 0 : i32
    %c0_i32_1 = arith.constant 0 : i32
    return %c0_i32, %c0_i32_0 : i32, i32
  }
  func.func @transform_5(%arg0: i32) -> (i32, i32) {
    %c0_i32 = arith.constant 0 : i32
    %c0_i32_0 = arith.constant 0 : i32
    %c0_i32_1 = arith.constant 0 : i32
    return %c0_i32, %c0_i32_0 : i32, i32
  }
  func.func @transform_6(%arg0: i32) -> (i32, i32) {
    %c0_i32 = arith.constant 0 : i32
    %c0_i32_0 = arith.constant 0 : i32
    return %arg0, %c0_i32 : i32, i32
  }
}

</mosaic_0001>

<llo_original>
// kernel: tpu_custom_call.1
$region0: #{tpu_custom_call.1}
  #allocation0 [shape = 'u32[]', space=smem, size = 0x4, offset = 0x4, fixed_abs, tag = 'smem constant byte address 0x4 - core index']
  #allocation1 [shape = 'u32[144,128]{1,0:T(1,128)}', space=vmem, size = 0x12000, scoped, tag = 'internal scratch']
  %s0 = inlined_call_operand.vmem [shape: bf16[16,784], index: 0, kind: input, shape index: {}]
  %s1 = inlined_call_operand.vmem [shape: bf16[784,130], index: 1, kind: input, shape index: {}]
  %s2 = inlined_call_operand.vmem [shape: f32[1,130], index: 2, kind: input, shape index: {}]
  %s3 = inlined_call_operand.vmem [shape: bf16[130,280], index: 3, kind: input, shape index: {}]
  %s4 = inlined_call_operand.vmem [shape: f32[1,280], index: 4, kind: input, shape index: {}]
  %s5 = inlined_call_operand.vmem [shape: bf16[280,128], index: 5, kind: input, shape index: {}]
  %s6 = inlined_call_operand.hbm [shape: f32[16,128], index: 6, kind: output, shape index: {}]
  %s7 = sld [smem:[#allocation0]]
  $region34: #{tpu_custom_call.1} parent=0
    _
  %s9 = ssub.s32 1, %s7
  %s10 = scalar_select 0, %s9, %s7
  $region1: #{tpu_custom_call.1} parent=0
    #allocation2 [shape = 'u8[8192]{0}', space=vmem, size = 0x2000, scoped, tag = 'output window, operand 0, single buffered']
    #allocation3 [shape = 's32[1]{0}', space=sflag, size = 0x4, scoped, tag = 'scoped memory for tpu_custom_call.1']
    %11 = vsyncpa [#allocation3], 0
    // Predicated region
    $region2: #{tpu_custom_call.1} parent=1 // pred_check
      _
    $region3: #{tpu_custom_call.1} parent=1 // pred_check_branch
      %13 = sbr.rel (0) target = $region5
    $region4: #{tpu_custom_call.1} parent=1 // pred_region
      _
    $region5: #{tpu_custom_call.1} parent=1 // pred_fallthru
      _
    // Predicated region
    $region6: #{tpu_custom_call.1} parent=1 // pred_check
      _
    $region7: #{tpu_custom_call.1} parent=1 // pred_check_branch
      %15 = sbr.rel (0) target = $region9
    $region8: #{tpu_custom_call.1} parent=1 // pred_region
      _
    $region9: #{tpu_custom_call.1} parent=1 // pred_fallthru
      _
    // Predicated region
    $region10: #{tpu_custom_call.1} parent=1 // pred_check
      _
    $region11: #{tpu_custom_call.1} parent=1 // pred_check_branch
      %17 = sbr.rel (0) target = $region13
    $region12: #{tpu_custom_call.1} parent=1 // pred_region
      _
    $region13: #{tpu_custom_call.1} parent=1 // pred_fallthru
      _
    // Predicated region
    $region14: #{tpu_custom_call.1} parent=1 // pred_check
      _
    $region15: #{tpu_custom_call.1} parent=1 // pred_check_branch
      %19 = sbr.rel (0) target = $region17
    $region16: #{tpu_custom_call.1} parent=1 // pred_region
      _
    $region17: #{tpu_custom_call.1} parent=1 // pred_fallthru
      _
    // Predicated region
    $region18: #{tpu_custom_call.1} parent=1 // pred_check
      _
    $region19: #{tpu_custom_call.1} parent=1 // pred_check_branch
      %21 = sbr.rel (0) target = $region21
    $region20: #{tpu_custom_call.1} parent=1 // pred_region
      _
    $region21: #{tpu_custom_call.1} parent=1 // pred_fallthru
      _
    // Predicated region
    $region22: #{tpu_custom_call.1} parent=1 // pred_check
      _
    $region23: #{tpu_custom_call.1} parent=1 // pred_check_branch
      %23 = sbr.rel (0) target = $region25
    $region24: #{tpu_custom_call.1} parent=1 // pred_region
      _
    $region25: #{tpu_custom_call.1} parent=1 // pred_fallthru
      _
    %v25 = vld [vmem:[%s0] sm:$0xff]
    %v26 = vld [vmem:[%s0 + $0x8] sm:$0xff]
    %v27 = vld [vmem:[%s0 + $0x10] sm:$0xff]
    %v28 = vld [vmem:[%s0 + $0x18] sm:$0xf]
    %v29 = vld [vmem:[%s0 + $0x1c] sm:$0xff]
    %v30 = vld [vmem:[%s0 + $0x24] sm:$0xff]
    %v31 = vld [vmem:[%s0 + $0x2c] sm:$0xff]
    %v32 = vld [vmem:[%s0 + $0x34] sm:$0xf]
    %v33 = vld [vmem:[%s1] sm:$0xff]
    %v34 = vld [vmem:[%s1 + $0x8] sm:$0xff]
    %v35 = vld [vmem:[%s1 + $0x10] sm:$0xff]
    %v36 = vld [vmem:[%s1 + $0x18] sm:$0xff]
    %v37 = vld [vmem:[%s1 + $0x20] sm:$0xff]
    %v38 = vld [vmem:[%s1 + $0x28] sm:$0xff]
    %v39 = vld [vmem:[%s1 + $0x30] sm:$0xff]
    %v40 = vld [vmem:[%s1 + $0x38] sm:$0xff]
    %v41 = vld [vmem:[%s1 + $0x40] sm:$0xff]
    %v42 = vld [vmem:[%s1 + $0x48] sm:$0xff]
    %v43 = vld [vmem:[%s1 + $0x50] sm:$0xff]
    %v44 = vld [vmem:[%s1 + $0x58] sm:$0xff]
    %v45 = vld [vmem:[%s1 + $0x60] sm:$0xff]
    %v46 = vld [vmem:[%s1 + $0x68] sm:$0xff]
    %v47 = vld [vmem:[%s1 + $0x70] sm:$0xff]
    %v48 = vld [vmem:[%s1 + $0x78] sm:$0xff]
    %v49 = vld [vmem:[%s1 + $0x80] sm:$0xff]
    %v50 = vld [vmem:[%s1 + $0x88] sm:$0xff]
    %v51 = vld [vmem:[%s1 + $0x90] sm:$0xff]
    %v52 = vld [vmem:[%s1 + $0x98] sm:$0xff]
    %v53 = vld [vmem:[%s1 + $0xa0] sm:$0xff]
    %v54 = vld [vmem:[%s1 + $0xa8] sm:$0xff]
    %v55 = vld [vmem:[%s1 + $0xb0] sm:$0xff]
    %v56 = vld [vmem:[%s1 + $0xb8] sm:$0xff]
    %v57 = vld [vmem:[%s1 + $0xc0] sm:$0xff]
    %v58 = vld [vmem:[%s1 + $0xc8] sm:$0xff]
    %v59 = vld [vmem:[%s1 + $0xd0] sm:$0xff]
    %v60 = vld [vmem:[%s1 + $0xd8] sm:$0xff]
    %v61 = vld [vmem:[%s1 + $0xe0] sm:$0xff]
    %v62 = vld [vmem:[%s1 + $0xe8] sm:$0xff]
    %v63 = vld [vmem:[%s1 + $0xf0] sm:$0xff]
    %v64 = vld [vmem:[%s1 + $0xf8] sm:$0xff]
    %v65 = vld [vmem:[%s1 + $0x100] sm:$0xff]
    %v66 = vld [vmem:[%s1 + $0x108] sm:$0xff]
    %v67 = vld [vmem:[%s1 + $0x110] sm:$0xff]
    %v68 = vld [vmem:[%s1 + $0x118] sm:$0xff]
    %v69 = vld [vmem:[%s1 + $0x120] sm:$0xff]
    %v70 = vld [vmem:[%s1 + $0x128] sm:$0xff]
    %v71 = vld [vmem:[%s1 + $0x130] sm:$0xff]
    %v72 = vld [vmem:[%s1 + $0x138] sm:$0xff]
    %v73 = vld [vmem:[%s1 + $0x140] sm:$0xff]
    %v74 = vld [vmem:[%s1 + $0x148] sm:$0xff]
    %v75 = vld [vmem:[%s1 + $0x150] sm:$0xff]
    %v76 = vld [vmem:[%s1 + $0x158] sm:$0xff]
    %v77 = vld [vmem:[%s1 + $0x160] sm:$0xff]
    %v78 = vld [vmem:[%s1 + $0x168] sm:$0xff]
    %v79 = vld [vmem:[%s1 + $0x170] sm:$0xff]
    %v80 = vld [vmem:[%s1 + $0x178] sm:$0xff]
    %v81 = vld [vmem:[%s1 + $0x180] sm:$0xff]
    %v82 = vld [vmem:[%s1 + $0x188] sm:$0xff]
    %v83 = vld [vmem:[%s1 + $0x190] sm:$0xff]
    %v84 = vld [vmem:[%s1 + $0x198] sm:$0xff]
    %v85 = vld [vmem:[%s1 + $0x1a0] sm:$0xff]
    %v86 = vld [vmem:[%s1 + $0x1a8] sm:$0xff]
    %v87 = vld [vmem:[%s1 + $0x1b0] sm:$0xff]
    %v88 = vld [vmem:[%s1 + $0x1b8] sm:$0xff]
    %v89 = vld [vmem:[%s1 + $0x1c0] sm:$0xff]
    %v90 = vld [vmem:[%s1 + $0x1c8] sm:$0xff]
    %v91 = vld [vmem:[%s1 + $0x1d0] sm:$0xff]
    %v92 = vld [vmem:[%s1 + $0x1d8] sm:$0xff]
    %v93 = vld [vmem:[%s1 + $0x1e0] sm:$0xff]
    %v94 = vld [vmem:[%s1 + $0x1e8] sm:$0xff]
    %v95 = vld [vmem:[%s1 + $0x1f0] sm:$0xff]
    %v96 = vld [vmem:[%s1 + $0x1f8] sm:$0xff]
    %v97 = vld [vmem:[%s1 + $0x200] sm:$0xff]
    %v98 = vld [vmem:[%s1 + $0x208] sm:$0xff]
    %v99 = vld [vmem:[%s1 + $0x210] sm:$0xff]
    %v100 = vld [vmem:[%s1 + $0x218] sm:$0xff]
    %v101 = vld [vmem:[%s1 + $0x220] sm:$0xff]
    %v102 = vld [vmem:[%s1 + $0x228] sm:$0xff]
    %v103 = vld [vmem:[%s1 + $0x230] sm:$0xff]
    %v104 = vld [vmem:[%s1 + $0x238] sm:$0xff]
    %v105 = vld [vmem:[%s1 + $0x240] sm:$0xff]
    %v106 = vld [vmem:[%s1 + $0x248] sm:$0xff]
    %v107 = vld [vmem:[%s1 + $0x250] sm:$0xff]
    %v108 = vld [vmem:[%s1 + $0x258] sm:$0xff]
    %v109 = vld [vmem:[%s1 + $0x260] sm:$0xff]
    %v110 = vld [vmem:[%s1 + $0x268] sm:$0xff]
    %v111 = vld [vmem:[%s1 + $0x270] sm:$0xff]
    %v112 = vld [vmem:[%s1 + $0x278] sm:$0xff]
    %v113 = vld [vmem:[%s1 + $0x280] sm:$0xff]
    %v114 = vld [vmem:[%s1 + $0x288] sm:$0xff]
    %v115 = vld [vmem:[%s1 + $0x290] sm:$0xff]
    %v116 = vld [vmem:[%s1 + $0x298] sm:$0xff]
    %v117 = vld [vmem:[%s1 + $0x2a0] sm:$0xff]
    %v118 = vld [vmem:[%s1 + $0x2a8] sm:$0xff]
    %v119 = vld [vmem:[%s1 + $0x2b0] sm:$0xff]
    %v120 = vld [vmem:[%s1 + $0x2b8] sm:$0xff]
    %v121 = vld [vmem:[%s1 + $0x2c0] sm:$0xff]
    %v122 = vld [vmem:[%s1 + $0x2c8] sm:$0xff]
    %v123 = vld [vmem:[%s1 + $0x2d0] sm:$0xff]
    %v124 = vld [vmem:[%s1 + $0x2d8] sm:$0xff]
    %v125 = vld [vmem:[%s1 + $0x2e0] sm:$0xff]
    %v126 = vld [vmem:[%s1 + $0x2e8] sm:$0xff]
    %v127 = vld [vmem:[%s1 + $0x2f0] sm:$0xff]
    %v128 = vld [vmem:[%s1 + $0x2f8] sm:$0xff]
    %v129 = vld [vmem:[%s1 + $0x300] sm:$0xff]
    %v130 = vld [vmem:[%s1 + $0x308] sm:$0xff]
    %v131 = vld [vmem:[%s2] sm:$0x3]
    %v133 = vlaneseq
    %v134 = vshrl.u32 %v133, 7
    %v135 = vsub.s32 0, %v134
    %v136 = vrot.slane %v131, %v135
    %v137 = vlaneseq
    %v138 = vshrl.u32 %v137, 7
    %v139 = vsub.s32 1, %v138
    %v140 = vrot.slane %v131, %v139
    %v151 = vunpack.c.l.b16 %v25
    %v152 = vunpack.c.h.b16 %v25
    %v153 = vunpack.c.l.b16 %v26
    %v154 = vunpack.c.h.b16 %v26
    %v155 = vunpack.c.l.b16 %v27
    %v156 = vunpack.c.h.b16 %v27
    %v157 = vunpack.c.l.b16 %v28
    %v158 = vunpack.c.l.b16 %v29
    %v159 = vunpack.c.h.b16 %v29
    %v160 = vunpack.c.l.b16 %v30
    %v161 = vunpack.c.h.b16 %v30
    %v162 = vunpack.c.l.b16 %v31
    %v163 = vunpack.c.h.b16 %v31
    %v164 = vunpack.c.l.b16 %v32
    %v165 = vpack.c.b16 %v158, %v151
    %v166 = vpack.c.b16 %v159, %v152
    %v167 = vpack.c.b16 %v160, %v153
    %v168 = vpack.c.b16 %v161, %v154
    %v169 = vpack.c.b16 %v162, %v155
    %v170 = vpack.c.b16 %v163, %v156
    %v171 = vpack.c.b16 %v164, %v157
    %v276 = vunpack.c.l.b16 %v33
    %v277 = vunpack.c.h.b16 %v33
    %v278 = vunpack.c.l.b16 %v34
    %v279 = vunpack.c.h.b16 %v34
    %v280 = vunpack.c.l.b16 %v35
    %v281 = vunpack.c.h.b16 %v35
    %v282 = vunpack.c.l.b16 %v36
    %v283 = vunpack.c.h.b16 %v36
    %v284 = vunpack.c.l.b16 %v37
    %v285 = vunpack.c.h.b16 %v37
    %v286 = vunpack.c.l.b16 %v38
    %v287 = vunpack.c.h.b16 %v38
    %v288 = vunpack.c.l.b16 %v39
    %v289 = vunpack.c.h.b16 %v39
    %v290 = vunpack.c.l.b16 %v40
    %v291 = vunpack.c.h.b16 %v40
    %v292 = vunpack.c.l.b16 %v41
    %v293 = vunpack.c.h.b16 %v41
    %v294 = vunpack.c.l.b16 %v42
    %v295 = vunpack.c.h.b16 %v42
    %v296 = vunpack.c.l.b16 %v43
    %v297 = vunpack.c.h.b16 %v43
    %v298 = vunpack.c.l.b16 %v44
    %v299 = vunpack.c.h.b16 %v44
    %v300 = vunpack.c.l.b16 %v45
    %v301 = vunpack.c.h.b16 %v45
    %v302 = vunpack.c.l.b16 %v46
    %v303 = vunpack.c.h.b16 %v46
    %v304 = vunpack.c.l.b16 %v47
    %v305 = vunpack.c.h.b16 %v47
    %v306 = vunpack.c.l.b16 %v48
    %v307 = vunpack.c.h.b16 %v48
    %v308 = vunpack.c.l.b16 %v49
    %v309 = vunpack.c.h.b16 %v49
    %v310 = vunpack.c.l.b16 %v50
    %v311 = vunpack.c.h.b16 %v50
    %v312 = vunpack.c.l.b16 %v51
    %v313 = vunpack.c.h.b16 %v51
    %v314 = vunpack.c.l.b16 %v52
    %v315 = vunpack.c.h.b16 %v52
    %v316 = vunpack.c.l.b16 %v53
    %v317 = vunpack.c.h.b16 %v53
    %v318 = vunpack.c.l.b16 %v54
    %v319 = vunpack.c.h.b16 %v54
    %v320 = vunpack.c.l.b16 %v55
    %v321 = vunpack.c.h.b16 %v55
    %v322 = vunpack.c.l.b16 %v56
    %v323 = vunpack.c.h.b16 %v56
    %v324 = vunpack.c.l.b16 %v57
    %v325 = vunpack.c.h.b16 %v57
    %v326 = vunpack.c.l.b16 %v58
    %v327 = vunpack.c.h.b16 %v58
    %v328 = vunpack.c.l.b16 %v59
    %v329 = vunpack.c.h.b16 %v59
    %v330 = vunpack.c.l.b16 %v60
    %v331 = vunpack.c.h.b16 %v60
    %v332 = vunpack.c.l.b16 %v61
    %v333 = vunpack.c.h.b16 %v61
    %v334 = vunpack.c.l.b16 %v62
    %v335 = vunpack.c.h.b16 %v62
    %v336 = vunpack.c.l.b16 %v63
    %v337 = vunpack.c.h.b16 %v63
    %v338 = vunpack.c.l.b16 %v64
    %v339 = vunpack.c.h.b16 %v64
    %v340 = vunpack.c.l.b16 %v65
    %v341 = vunpack.c.h.b16 %v65
    %v342 = vunpack.c.l.b16 %v66
    %v343 = vunpack.c.h.b16 %v66
    %v344 = vunpack.c.l.b16 %v67
    %v345 = vunpack.c.h.b16 %v67
    %v346 = vunpack.c.l.b16 %v68
    %v347 = vunpack.c.h.b16 %v68
    %v348 = vunpack.c.l.b16 %v69
    %v349 = vunpack.c.h.b16 %v69
    %v350 = vunpack.c.l.b16 %v70
    %v351 = vunpack.c.h.b16 %v70
    %v352 = vunpack.c.l.b16 %v71
    %v353 = vunpack.c.h.b16 %v71
    %v354 = vunpack.c.l.b16 %v72
    %v355 = vunpack.c.h.b16 %v72
    %v356 = vunpack.c.l.b16 %v73
    %v357 = vunpack.c.h.b16 %v73
    %v358 = vunpack.c.l.b16 %v74
    %v359 = vunpack.c.h.b16 %v74
    %v360 = vunpack.c.l.b16 %v75
    %v361 = vunpack.c.h.b16 %v75
    %v362 = vunpack.c.l.b16 %v76
    %v363 = vunpack.c.h.b16 %v76
    %v364 = vunpack.c.l.b16 %v77
    %v365 = vunpack.c.h.b16 %v77
    %v366 = vunpack.c.l.b16 %v78
    %v367 = vunpack.c.h.b16 %v78
    %v368 = vunpack.c.l.b16 %v79
    %v369 = vunpack.c.h.b16 %v79
    %v370 = vunpack.c.l.b16 %v80
    %v371 = vunpack.c.h.b16 %v80
    %v372 = vunpack.c.l.b16 %v81
    %v373 = vunpack.c.h.b16 %v81
    %v374 = vunpack.c.l.b16 %v82
    %v375 = vunpack.c.h.b16 %v82
    %v376 = vunpack.c.l.b16 %v83
    %v377 = vunpack.c.h.b16 %v83
    %v378 = vunpack.c.l.b16 %v84
    %v379 = vunpack.c.h.b16 %v84
    %v380 = vunpack.c.l.b16 %v85
    %v381 = vunpack.c.h.b16 %v85
    %v382 = vunpack.c.l.b16 %v86
    %v383 = vunpack.c.h.b16 %v86
    %v384 = vunpack.c.l.b16 %v87
    %v385 = vunpack.c.h.b16 %v87
    %v386 = vunpack.c.l.b16 %v88
    %v387 = vunpack.c.h.b16 %v88
    %v388 = vunpack.c.l.b16 %v89
    %v389 = vunpack.c.h.b16 %v89
    %v390 = vunpack.c.l.b16 %v90
    %v391 = vunpack.c.h.b16 %v90
    %v392 = vunpack.c.l.b16 %v91
    %v393 = vunpack.c.h.b16 %v91
    %v394 = vunpack.c.l.b16 %v92
    %v395 = vunpack.c.h.b16 %v92
    %v396 = vunpack.c.l.b16 %v93
    %v397 = vunpack.c.h.b16 %v93
    %v398 = vunpack.c.l.b16 %v94
    %v399 = vunpack.c.h.b16 %v94
    %v400 = vunpack.c.l.b16 %v95
    %v401 = vunpack.c.h.b16 %v95
    %v402 = vunpack.c.l.b16 %v96
    %v403 = vunpack.c.h.b16 %v96
    %v404 = vunpack.c.l.b16 %v97
    %v405 = vunpack.c.h.b16 %v97
    %v406 = vunpack.c.l.b16 %v98
    %v407 = vunpack.c.h.b16 %v98
    %v408 = vunpack.c.l.b16 %v99
    %v409 = vunpack.c.h.b16 %v99
    %v410 = vunpack.c.l.b16 %v100
    %v411 = vunpack.c.h.b16 %v100
    %v412 = vunpack.c.l.b16 %v101
    %v413 = vunpack.c.h.b16 %v101
    %v414 = vunpack.c.l.b16 %v102
    %v415 = vunpack.c.h.b16 %v102
    %v416 = vunpack.c.l.b16 %v103
    %v417 = vunpack.c.h.b16 %v103
    %v418 = vunpack.c.l.b16 %v104
    %v419 = vunpack.c.h.b16 %v104
    %v420 = vunpack.c.l.b16 %v105
    %v421 = vunpack.c.h.b16 %v105
    %v422 = vunpack.c.l.b16 %v106
    %v423 = vunpack.c.h.b16 %v106
    %v424 = vunpack.c.l.b16 %v107
    %v425 = vunpack.c.h.b16 %v107
    %v426 = vunpack.c.l.b16 %v108
    %v427 = vunpack.c.h.b16 %v108
    %v428 = vunpack.c.l.b16 %v109
    %v429 = vunpack.c.h.b16 %v109
    %v430 = vunpack.c.l.b16 %v110
    %v431 = vunpack.c.h.b16 %v110
    %v432 = vunpack.c.l.b16 %v111
    %v433 = vunpack.c.h.b16 %v111
    %v434 = vunpack.c.l.b16 %v112
    %v435 = vunpack.c.h.b16 %v112
    %v436 = vunpack.c.l.b16 %v113
    %v437 = vunpack.c.h.b16 %v113
    %v438 = vunpack.c.l.b16 %v114
    %v439 = vunpack.c.h.b16 %v114
    %v440 = vunpack.c.l.b16 %v115
    %v441 = vunpack.c.h.b16 %v115
    %v442 = vunpack.c.l.b16 %v116
    %v443 = vunpack.c.h.b16 %v116
    %v444 = vunpack.c.l.b16 %v117
    %v445 = vunpack.c.h.b16 %v117
    %v446 = vunpack.c.l.b16 %v118
    %v447 = vunpack.c.h.b16 %v118
    %v448 = vunpack.c.l.b16 %v119
    %v449 = vunpack.c.h.b16 %v119
    %v450 = vunpack.c.l.b16 %v120
    %v451 = vunpack.c.h.b16 %v120
    %v452 = vunpack.c.l.b16 %v121
    %v453 = vunpack.c.h.b16 %v121
    %v454 = vunpack.c.l.b16 %v122
    %v455 = vunpack.c.h.b16 %v122
    %v456 = vunpack.c.l.b16 %v123
    %v457 = vunpack.c.h.b16 %v123
    %v458 = vunpack.c.l.b16 %v124
    %v459 = vunpack.c.h.b16 %v124
    %v460 = vunpack.c.l.b16 %v125
    %v461 = vunpack.c.h.b16 %v125
    %v462 = vunpack.c.l.b16 %v126
    %v463 = vunpack.c.h.b16 %v126
    %v464 = vunpack.c.l.b16 %v127
    %v465 = vunpack.c.h.b16 %v127
    %v466 = vunpack.c.l.b16 %v128
    %v467 = vunpack.c.h.b16 %v128
    %v468 = vunpack.c.l.b16 %v129
    %v469 = vunpack.c.h.b16 %v129
    %v470 = vunpack.c.l.b16 %v130
    %v471 = vunpack.c.h.b16 %v130
    %v472 = vpack.c.b16 %v278, %v276
    %v473 = vpack.c.b16 %v279, %v277
    %v474 = vpack.c.b16 %v282, %v280
    %v475 = vpack.c.b16 %v283, %v281
    %v476 = vpack.c.b16 %v286, %v284
    %v477 = vpack.c.b16 %v287, %v285
    %v478 = vpack.c.b16 %v290, %v288
    %v479 = vpack.c.b16 %v291, %v289
    %v480 = vpack.c.b16 %v294, %v292
    %v481 = vpack.c.b16 %v295, %v293
    %v482 = vpack.c.b16 %v298, %v296
    %v483 = vpack.c.b16 %v299, %v297
    %v484 = vpack.c.b16 %v302, %v300
    %v485 = vpack.c.b16 %v303, %v301
    %v486 = vpack.c.b16 %v306, %v304
    %v487 = vpack.c.b16 %v307, %v305
    %v488 = vpack.c.b16 %v310, %v308
    %v489 = vpack.c.b16 %v311, %v309
    %v490 = vpack.c.b16 %v314, %v312
    %v491 = vpack.c.b16 %v315, %v313
    %v492 = vpack.c.b16 %v318, %v316
    %v493 = vpack.c.b16 %v319, %v317
    %v494 = vpack.c.b16 %v322, %v320
    %v495 = vpack.c.b16 %v323, %v321
    %v496 = vpack.c.b16 %v326, %v324
    %v497 = vpack.c.b16 %v327, %v325
    %v498 = vpack.c.b16 %v330, %v328
    %v499 = vpack.c.b16 %v331, %v329
    %v500 = vpack.c.b16 %v334, %v332
    %v501 = vpack.c.b16 %v335, %v333
    %v502 = vpack.c.b16 %v338, %v336
    %v503 = vpack.c.b16 %v339, %v337
    %v504 = vpack.c.b16 %v342, %v340
    %v505 = vpack.c.b16 %v343, %v341
    %v506 = vpack.c.b16 %v346, %v344
    %v507 = vpack.c.b16 %v347, %v345
    %v508 = vpack.c.b16 %v350, %v348
    %v509 = vpack.c.b16 %v351, %v349
    %v510 = vpack.c.b16 %v354, %v352
    %v511 = vpack.c.b16 %v355, %v353
    %v512 = vpack.c.b16 %v358, %v356
    %v513 = vpack.c.b16 %v359, %v357
    %v514 = vpack.c.b16 %v362, %v360
    %v515 = vpack.c.b16 %v363, %v361
    %v516 = vpack.c.b16 %v366, %v364
    %v517 = vpack.c.b16 %v367, %v365
    %v518 = vpack.c.b16 %v370, %v368
    %v519 = vpack.c.b16 %v371, %v369
    %v520 = vpack.c.b16 %v374, %v372
    %v521 = vpack.c.b16 %v375, %v373
    %v522 = vpack.c.b16 %v378, %v376
    %v523 = vpack.c.b16 %v379, %v377
    %v524 = vpack.c.b16 %v382, %v380
    %v525 = vpack.c.b16 %v383, %v381
    %v526 = vpack.c.b16 %v386, %v384
    %v527 = vpack.c.b16 %v387, %v385
    %v528 = vpack.c.b16 %v390, %v388
    %v529 = vpack.c.b16 %v391, %v389
    %v530 = vpack.c.b16 %v394, %v392
    %v531 = vpack.c.b16 %v395, %v393
    %v532 = vpack.c.b16 %v398, %v396
    %v533 = vpack.c.b16 %v399, %v397
    %v534 = vpack.c.b16 %v402, %v400
    %v535 = vpack.c.b16 %v403, %v401
    %v536 = vpack.c.b16 %v406, %v404
    %v537 = vpack.c.b16 %v407, %v405
    %v538 = vpack.c.b16 %v410, %v408
    %v539 = vpack.c.b16 %v411, %v409
    %v540 = vpack.c.b16 %v414, %v412
    %v541 = vpack.c.b16 %v415, %v413
    %v542 = vpack.c.b16 %v418, %v416
    %v543 = vpack.c.b16 %v419, %v417
    %v544 = vpack.c.b16 %v422, %v420
    %v545 = vpack.c.b16 %v423, %v421
    %v546 = vpack.c.b16 %v426, %v424
    %v547 = vpack.c.b16 %v427, %v425
    %v548 = vpack.c.b16 %v430, %v428
    %v549 = vpack.c.b16 %v431, %v429
    %v550 = vpack.c.b16 %v434, %v432
    %v551 = vpack.c.b16 %v435, %v433
    %v552 = vpack.c.b16 %v438, %v436
    %v553 = vpack.c.b16 %v439, %v437
    %v554 = vpack.c.b16 %v442, %v440
    %v555 = vpack.c.b16 %v443, %v441
    %v556 = vpack.c.b16 %v446, %v444
    %v557 = vpack.c.b16 %v447, %v445
    %v558 = vpack.c.b16 %v450, %v448
    %v559 = vpack.c.b16 %v451, %v449
    %v560 = vpack.c.b16 %v454, %v452
    %v561 = vpack.c.b16 %v455, %v453
    %v562 = vpack.c.b16 %v458, %v456
    %v563 = vpack.c.b16 %v459, %v457
    %v564 = vpack.c.b16 %v462, %v460
    %v565 = vpack.c.b16 %v463, %v461
    %v566 = vpack.c.b16 %v466, %v464
    %v567 = vpack.c.b16 %v467, %v465
    %v568 = vpack.c.b16 %v470, %v468
    %v569 = vpack.c.b16 %v471, %v469
    %vm668 = vcmask 130048
    %v670 = vsel %vm668, %v171, 0
    %672 = vmatprep.subr.bf16.mxu0 %v473
    %673 = vmatpush1.bf16.msra.mxu0 %v472
    %674 = vmatprep.subr.bf16.mxu0 %v475
    %675 = vmatpush1.bf16.msra.mxu0 %v474
    %676 = vmatprep.subr.bf16.mxu0 %v477
    %677 = vmatpush1.bf16.msra.mxu0 %v476
    %678 = vmatprep.subr.bf16.mxu0 %v479
    %679 = vmatpush1.bf16.msra.mxu0 %v478
    %680 = vmatprep.subr.bf16.mxu0 %v481
    %681 = vmatpush1.bf16.msra.mxu0 %v480
    %682 = vmatprep.subr.bf16.mxu0 %v483
    %683 = vmatpush1.bf16.msra.mxu0 %v482
    %684 = vmatprep.subr.bf16.mxu0 %v485
    %685 = vmatpush1.bf16.msra.mxu0 %v484
    %686 = vmatprep.subr.bf16.mxu0 %v487
    %687 = vmatpush1.bf16.msra.mxu0 %v486
    %688 = vmatprep.subr.bf16.mxu0 %v489
    %689 = vmatpush1.bf16.msra.mxu0 %v488
    %690 = vmatprep.subr.bf16.mxu0 %v491
    %691 = vmatpush1.bf16.msra.mxu0 %v490
    %692 = vmatprep.subr.bf16.mxu0 %v493
    %693 = vmatpush1.bf16.msra.mxu0 %v492
    %694 = vmatprep.subr.bf16.mxu0 %v495
    %695 = vmatpush1.bf16.msra.mxu0 %v494
    %696 = vmatprep.subr.bf16.mxu0 %v497
    %697 = vmatpush1.bf16.msra.mxu0 %v496
    %698 = vmatprep.subr.bf16.mxu0 %v499
    %699 = vmatpush1.bf16.msra.mxu0 %v498
    %700 = vmatprep.subr.bf16.mxu0 %v501
    %701 = vmatpush1.bf16.msra.mxu0 %v500
    %702 = vmatprep.subr.bf16.mxu0 %v503
    %703 = vmatpush1.bf16.msra.mxu0 %v502
    %704 = vmatprep.mubr.bf16.mxu0 %v166
    %705 = vmatmul.mubr.bf16.gmra.mrb[0].mxu0 %v165
    %v706 = vpop.f32.mrb[0].mxu0
    %v707 = vadd.f32 %v136, %v706
    %v708 = vpop.f32.mrb[0].mxu0
    %v709 = vadd.f32 %v140, %v708
    %v710 = vpop.f32.mrb[0].mxu0
    %v711 = vadd.f32 %v136, %v710
    %v712 = vpop.f32.mrb[0].mxu0
    %v713 = vadd.f32 %v140, %v712
    %714 = vdwg.mxu0
    %715 = vmatprep.subr.bf16.mxu0 %v505
    %716 = vmatpush1.bf16.msra.mxu0 %v504
    %717 = vmatprep.subr.bf16.mxu0 %v507
    %718 = vmatpush1.bf16.msra.mxu0 %v506
    %719 = vmatprep.subr.bf16.mxu0 %v509
    %720 = vmatpush1.bf16.msra.mxu0 %v508
    %721 = vmatprep.subr.bf16.mxu0 %v511
    %722 = vmatpush1.bf16.msra.mxu0 %v510
    %723 = vmatprep.subr.bf16.mxu0 %v513
    %724 = vmatpush1.bf16.msra.mxu0 %v512
    %725 = vmatprep.subr.bf16.mxu0 %v515
    %726 = vmatpush1.bf16.msra.mxu0 %v514
    %727 = vmatprep.subr.bf16.mxu0 %v517
    %728 = vmatpush1.bf16.msra.mxu0 %v516
    %729 = vmatprep.subr.bf16.mxu0 %v519
    %730 = vmatpush1.bf16.msra.mxu0 %v518
    %731 = vmatprep.subr.bf16.mxu0 %v521
    %732 = vmatpush1.bf16.msra.mxu0 %v520
    %733 = vmatprep.subr.bf16.mxu0 %v523
    %734 = vmatpush1.bf16.msra.mxu0 %v522
    %735 = vmatprep.subr.bf16.mxu0 %v525
    %736 = vmatpush1.bf16.msra.mxu0 %v524
    %737 = vmatprep.subr.bf16.mxu0 %v527
    %738 = vmatpush1.bf16.msra.mxu0 %v526
    %739 = vmatprep.subr.bf16.mxu0 %v529
    %740 = vmatpush1.bf16.msra.mxu0 %v528
    %741 = vmatprep.subr.bf16.mxu0 %v531
    %742 = vmatpush1.bf16.msra.mxu0 %v530
    %743 = vmatprep.subr.bf16.mxu0 %v533
    %744 = vmatpush1.bf16.msra.mxu0 %v532
    %745 = vmatprep.subr.bf16.mxu0 %v535
    %746 = vmatpush1.bf16.msra.mxu0 %v534
    %747 = vmatprep.mubr.bf16.mxu0 %v168
    %748 = vmatmul.mubr.bf16.gmra.mrb[0].mxu0 %v167
    %v749 = vpop.f32.mrb[0].mxu0
    %v750 = vadd.f32 %v707, %v749
    %v751 = vpop.f32.mrb[0].mxu0
    %v752 = vadd.f32 %v709, %v751
    %v753 = vpop.f32.mrb[0].mxu0
    %v754 = vadd.f32 %v711, %v753
    %v755 = vpop.f32.mrb[0].mxu0
    %v756 = vadd.f32 %v713, %v755
    %757 = vdwg.mxu0
    %758 = vmatprep.subr.bf16.mxu0 %v537
    %759 = vmatpush1.bf16.msra.mxu0 %v536
    %760 = vmatprep.subr.bf16.mxu0 %v539
    %761 = vmatpush1.bf16.msra.mxu0 %v538
    %762 = vmatprep.subr.bf16.mxu0 %v541
    %763 = vmatpush1.bf16.msra.mxu0 %v540
    %764 = vmatprep.subr.bf16.mxu0 %v543
    %765 = vmatpush1.bf16.msra.mxu0 %v542
    %766 = vmatprep.subr.bf16.mxu0 %v545
    %767 = vmatpush1.bf16.msra.mxu0 %v544
    %768 = vmatprep.subr.bf16.mxu0 %v547
    %769 = vmatpush1.bf16.msra.mxu0 %v546
    %770 = vmatprep.subr.bf16.mxu0 %v549
    %771 = vmatpush1.bf16.msra.mxu0 %v548
    %772 = vmatprep.subr.bf16.mxu0 %v551
    %773 = vmatpush1.bf16.msra.mxu0 %v550
    %774 = vmatprep.subr.bf16.mxu0 %v553
    %775 = vmatpush1.bf16.msra.mxu0 %v552
    %776 = vmatprep.subr.bf16.mxu0 %v555
    %777 = vmatpush1.bf16.msra.mxu0 %v554
    %778 = vmatprep.subr.bf16.mxu0 %v557
    %779 = vmatpush1.bf16.msra.mxu0 %v556
    %780 = vmatprep.subr.bf16.mxu0 %v559
    %781 = vmatpush1.bf16.msra.mxu0 %v558
    %782 = vmatprep.subr.bf16.mxu0 %v561
    %783 = vmatpush1.bf16.msra.mxu0 %v560
    %784 = vmatprep.subr.bf16.mxu0 %v563
    %785 = vmatpush1.bf16.msra.mxu0 %v562
    %786 = vmatprep.subr.bf16.mxu0 %v565
    %787 = vmatpush1.bf16.msra.mxu0 %v564
    %788 = vmatprep.subr.bf16.mxu0 %v567
    %789 = vmatpush1.bf16.msra.mxu0 %v566
    %790 = vmatprep.mubr.bf16.mxu0 %v170
    %791 = vmatmul.mubr.bf16.gmra.mrb[0].mxu0 %v169
    %v792 = vpop.f32.mrb[0].mxu0
    %v793 = vadd.f32 %v750, %v792
    %v794 = vpop.f32.mrb[0].mxu0
    %v795 = vadd.f32 %v752, %v794
    %v796 = vpop.f32.mrb[0].mxu0
    %v797 = vadd.f32 %v754, %v796
    %v798 = vpop.f32.mrb[0].mxu0
    %v799 = vadd.f32 %v756, %v798
    %800 = vdwg.mxu0
    %801 = vmatprep.subr.bf16.mxu0 %v569
    %802 = vmatpush1.bf16.msra.mxu0 %v568
    %803 = vmatprep.subr.bf16.mxu0 0
    %804 = vmatpush1.bf16.msra.mxu0 0
    %805 = vmatprep.subr.bf16.mxu0 0
    %806 = vmatpush1.bf16.msra.mxu0 0
    %807 = vmatprep.subr.bf16.mxu0 0
    %808 = vmatpush1.bf16.msra.mxu0 0
    %809 = vmatprep.subr.bf16.mxu0 0
    %810 = vmatpush1.bf16.msra.mxu0 0
    %811 = vmatprep.subr.bf16.mxu0 0
    %812 = vmatpush1.bf16.msra.mxu0 0
    %813 = vmatprep.subr.bf16.mxu0 0
    %814 = vmatpush1.bf16.msra.mxu0 0
    %815 = vmatprep.subr.bf16.mxu0 0
    %816 = vmatpush1.bf16.msra.mxu0 0
    %817 = vmatprep.subr.bf16.mxu0 0
    %818 = vmatpush1.bf16.msra.mxu0 0
    %819 = vmatprep.subr.bf16.mxu0 0
    %820 = vmatpush1.bf16.msra.mxu0 0
    %821 = vmatprep.subr.bf16.mxu0 0
    %822 = vmatpush1.bf16.msra.mxu0 0
    %823 = vmatprep.subr.bf16.mxu0 0
    %824 = vmatpush1.bf16.msra.mxu0 0
    %825 = vmatprep.subr.bf16.mxu0 0
    %826 = vmatpush1.bf16.msra.mxu0 0
    %827 = vmatprep.subr.bf16.mxu0 0
    %828 = vmatpush1.bf16.msra.mxu0 0
    %829 = vmatprep.subr.bf16.mxu0 0
    %830 = vmatpush1.bf16.msra.mxu0 0
    %831 = vmatprep.subr.bf16.mxu0 0
    %832 = vmatpush1.bf16.msra.mxu0 0
    %833 = vmatprep.mubr.bf16.mxu0 0
    %834 = vmatmul.mubr.bf16.gmra.mrb[0].mxu0 %v670
    %v835 = vpop.f32.mrb[0].mxu0
    %v836 = vadd.f32 %v793, %v835
    %v837 = vpop.f32.mrb[0].mxu0
    %v838 = vadd.f32 %v795, %v837
    %v839 = vpop.f32.mrb[0].mxu0
    %v840 = vadd.f32 %v797, %v839
    %v841 = vpop.f32.mrb[0].mxu0
    %v842 = vadd.f32 %v799, %v841
    %843 = vdwg.mxu0
    %v844 = vtanh.pop %v836
    %v845 = vtanh.pop %v838
    %v846 = vtanh.pop %v840
    %v847 = vtanh.pop %v842
    %v848 = vpack.c.bf16 %v846, %v844
    %v849 = vpack.c.bf16 %v847, %v845
    %v850 = vld [vmem:[%s3] sm:$0xff]
    %v851 = vld [vmem:[%s3 + $0x8] sm:$0xf]
    %v852 = vld [vmem:[%s3 + $0xc] sm:$0xff]
    %v853 = vld [vmem:[%s3 + $0x14] sm:$0xf]
    %v854 = vld [vmem:[%s3 + $0x18] sm:$0xff]
    %v855 = vld [vmem:[%s3 + $0x20] sm:$0xf]
    %v856 = vld [vmem:[%s3 + $0x24] sm:$0xff]
    %v857 = vld [vmem:[%s3 + $0x2c] sm:$0xf]
    %v858 = vld [vmem:[%s3 + $0x30] sm:$0xff]
    %v859 = vld [vmem:[%s3 + $0x38] sm:$0xf]
    %v860 = vld [vmem:[%s3 + $0x3c] sm:$0xff]
    %v861 = vld [vmem:[%s3 + $0x44] sm:$0xf]
    %v862 = vld [vmem:[%s3 + $0x48] sm:$0xff]
    %v863 = vld [vmem:[%s3 + $0x50] sm:$0xf]
    %v864 = vld [vmem:[%s3 + $0x54] sm:$0xff]
    %v865 = vld [vmem:[%s3 + $0x5c] sm:$0xf]
    %v866 = vld [vmem:[%s3 + $0x60] sm:$0xff]
    %v867 = vld [vmem:[%s3 + $0x68] sm:$0xf]
    %v868 = vld [vmem:[%s3 + $0x6c] sm:$0xff]
    %v869 = vld [vmem:[%s3 + $0x74] sm:$0xf]
    %v870 = vld [vmem:[%s3 + $0x78] sm:$0xff]
    %v871 = vld [vmem:[%s3 + $0x80] sm:$0xf]
    %v872 = vld [vmem:[%s3 + $0x84] sm:$0xff]
    %v873 = vld [vmem:[%s3 + $0x8c] sm:$0xf]
    %v874 = vld [vmem:[%s3 + $0x90] sm:$0xff]
    %v875 = vld [vmem:[%s3 + $0x98] sm:$0xf]
    %v876 = vld [vmem:[%s3 + $0x9c] sm:$0xff]
    %v877 = vld [vmem:[%s3 + $0xa4] sm:$0xf]
    %v878 = vld [vmem:[%s3 + $0xa8] sm:$0xff]
    %v879 = vld [vmem:[%s3 + $0xb0] sm:$0xf]
    %v880 = vld [vmem:[%s3 + $0xb4] sm:$0xff]
    %v881 = vld [vmem:[%s3 + $0xbc] sm:$0xf]
    %v882 = vld [vmem:[%s3 + $0xc0] sm:$0x11]
    %v883 = vld [vmem:[%s3 + $0xc8] sm:$0x1]
    %v884 = vld [vmem:[%s4] sm:$0x7]
    %v886 = vlaneseq
    %v887 = vshrl.u32 %v886, 7
    %v888 = vsub.s32 0, %v887
    %v889 = vrot.slane %v884, %v888
    %v890 = vlaneseq
    %v891 = vshrl.u32 %v890, 7
    %v892 = vsub.s32 1, %v891
    %v893 = vrot.slane %v884, %v892
    %v894 = vlaneseq
    %v895 = vshrl.u32 %v894, 7
    %v896 = vsub.s32 2, %v895
    %v897 = vrot.slane %v884, %v896
    %v935 = vunpack.c.l.b16 %v850
    %v936 = vunpack.c.h.b16 %v850
    %v937 = vunpack.c.l.b16 %v851
    %v938 = vunpack.c.l.b16 %v852
    %v939 = vunpack.c.h.b16 %v852
    %v940 = vunpack.c.l.b16 %v853
    %v941 = vunpack.c.l.b16 %v854
    %v942 = vunpack.c.h.b16 %v854
    %v943 = vunpack.c.l.b16 %v855
    %v944 = vunpack.c.l.b16 %v856
    %v945 = vunpack.c.h.b16 %v856
    %v946 = vunpack.c.l.b16 %v857
    %v947 = vunpack.c.l.b16 %v858
    %v948 = vunpack.c.h.b16 %v858
    %v949 = vunpack.c.l.b16 %v859
    %v950 = vunpack.c.l.b16 %v860
    %v951 = vunpack.c.h.b16 %v860
    %v952 = vunpack.c.l.b16 %v861
    %v953 = vunpack.c.l.b16 %v862
    %v954 = vunpack.c.h.b16 %v862
    %v955 = vunpack.c.l.b16 %v863
    %v956 = vunpack.c.l.b16 %v864
    %v957 = vunpack.c.h.b16 %v864
    %v958 = vunpack.c.l.b16 %v865
    %v959 = vunpack.c.l.b16 %v866
    %v960 = vunpack.c.h.b16 %v866
    %v961 = vunpack.c.l.b16 %v867
    %v962 = vunpack.c.l.b16 %v868
    %v963 = vunpack.c.h.b16 %v868
    %v964 = vunpack.c.l.b16 %v869
    %v965 = vunpack.c.l.b16 %v870
    %v966 = vunpack.c.h.b16 %v870
    %v967 = vunpack.c.l.b16 %v871
    %v968 = vunpack.c.l.b16 %v872
    %v969 = vunpack.c.h.b16 %v872
    %v970 = vunpack.c.l.b16 %v873
    %v971 = vunpack.c.l.b16 %v874
    %v972 = vunpack.c.h.b16 %v874
    %v973 = vunpack.c.l.b16 %v875
    %v974 = vunpack.c.l.b16 %v876
    %v975 = vunpack.c.h.b16 %v876
    %v976 = vunpack.c.l.b16 %v877
    %v977 = vunpack.c.l.b16 %v878
    %v978 = vunpack.c.h.b16 %v878
    %v979 = vunpack.c.l.b16 %v879
    %v980 = vunpack.c.l.b16 %v880
    %v981 = vunpack.c.h.b16 %v880
    %v982 = vunpack.c.l.b16 %v881
    %v983 = vunpack.c.l.b16 %v882
    %v984 = vunpack.c.h.b16 %v882
    %v985 = vunpack.c.l.b16 %v883
    %v986 = vpack.c.b16 %v938, %v935
    %v987 = vpack.c.b16 %v939, %v936
    %v988 = vpack.c.b16 %v940, %v937
    %v989 = vpack.c.b16 %v944, %v941
    %v990 = vpack.c.b16 %v945, %v942
    %v991 = vpack.c.b16 %v946, %v943
    %v992 = vpack.c.b16 %v950, %v947
    %v993 = vpack.c.b16 %v951, %v948
    %v994 = vpack.c.b16 %v952, %v949
    %v995 = vpack.c.b16 %v956, %v953
    %v996 = vpack.c.b16 %v957, %v954
    %v997 = vpack.c.b16 %v958, %v955
    %v998 = vpack.c.b16 %v962, %v959
    %v999 = vpack.c.b16 %v963, %v960
    %v1000 = vpack.c.b16 %v964, %v961
    %v1001 = vpack.c.b16 %v968, %v965
    %v1002 = vpack.c.b16 %v969, %v966
    %v1003 = vpack.c.b16 %v970, %v967
    %v1004 = vpack.c.b16 %v974, %v971
    %v1005 = vpack.c.b16 %v975, %v972
    %v1006 = vpack.c.b16 %v976, %v973
    %v1007 = vpack.c.b16 %v980, %v977
    %v1008 = vpack.c.b16 %v981, %v978
    %v1009 = vpack.c.b16 %v982, %v979
    %v1010 = vpack.c.b16 %v983, %v983
    %v1011 = vpack.c.b16 %v984, %v984
    %v1012 = vpack.c.b16 %v985, %v985
    %vm1037 = vcmask 15360
    %v1039 = vsel %vm1037, %v849, 0
    %vm1041 = vcmask 1040384
    %v1043 = vsel %vm1041, %v1010, 0
    %v1046 = vsel %vm1041, %v1011, 0
    %v1049 = vsel %vm1041, %v1012, 0
    %1051 = vmatprep.subr.bf16.mxu0 %v987
    %1052 = vmatpush1.bf16.msra.mxu0 %v986
    %1053 = vmatprep.subr.bf16.mxu0 %v990
    %1054 = vmatpush1.bf16.msra.mxu0 %v989
    %1055 = vmatprep.subr.bf16.mxu0 %v993
    %1056 = vmatpush1.bf16.msra.mxu0 %v992
    %1057 = vmatprep.subr.bf16.mxu0 %v996
    %1058 = vmatpush1.bf16.msra.mxu0 %v995
    %1059 = vmatprep.subr.bf16.mxu0 %v999
    %1060 = vmatpush1.bf16.msra.mxu0 %v998
    %1061 = vmatprep.subr.bf16.mxu0 %v1002
    %1062 = vmatpush1.bf16.msra.mxu0 %v1001
    %1063 = vmatprep.subr.bf16.mxu0 %v1005
    %1064 = vmatpush1.bf16.msra.mxu0 %v1004
    %1065 = vmatprep.subr.bf16.mxu0 %v1008
    %1066 = vmatpush1.bf16.msra.mxu0 %v1007
    %1067 = vmatprep.subr.bf16.mxu0 %v1046
    %1068 = vmatpush1.bf16.msra.mxu0 %v1043
    %1069 = vmatprep.subr.bf16.mxu0 0
    %1070 = vmatpush1.bf16.msra.mxu0 0
    %1071 = vmatprep.subr.bf16.mxu0 0
    %1072 = vmatpush1.bf16.msra.mxu0 0
    %1073 = vmatprep.subr.bf16.mxu0 0
    %1074 = vmatpush1.bf16.msra.mxu0 0
    %1075 = vmatprep.subr.bf16.mxu0 0
    %1076 = vmatpush1.bf16.msra.mxu0 0
    %1077 = vmatprep.subr.bf16.mxu0 0
    %1078 = vmatpush1.bf16.msra.mxu0 0
    %1079 = vmatprep.subr.bf16.mxu0 0
    %1080 = vmatpush1.bf16.msra.mxu0 0
    %1081 = vmatprep.subr.bf16.mxu0 0
    %1082 = vmatpush1.bf16.msra.mxu0 0
    %1083 = vmatprep.mubr.bf16.mxu0 %v1039
    %1084 = vmatmul.mubr.bf16.gmra.mrb[0].mxu0 %v848
    %v1085 = vpop.f32.mrb[0].mxu0
    %v1086 = vadd.f32 %v889, %v1085
    %v1087 = vpop.f32.mrb[0].mxu0
    %v1088 = vadd.f32 %v893, %v1087
    %v1089 = vpop.f32.mrb[0].mxu0
    %v1090 = vadd.f32 %v889, %v1089
    %v1091 = vpop.f32.mrb[0].mxu0
    %v1092 = vadd.f32 %v893, %v1091
    %1093 = vdwg.mxu0
    %1094 = vmatprep.subr.bf16.mxu0 0
    %1095 = vmatpush1.bf16.msra.mxu0 %v988
    %1096 = vmatprep.subr.bf16.mxu0 0
    %1097 = vmatpush1.bf16.msra.mxu0 %v991
    %1098 = vmatprep.subr.bf16.mxu0 0
    %1099 = vmatpush1.bf16.msra.mxu0 %v994
    %1100 = vmatprep.subr.bf16.mxu0 0
    %1101 = vmatpush1.bf16.msra.mxu0 %v997
    %1102 = vmatprep.subr.bf16.mxu0 0
    %1103 = vmatpush1.bf16.msra.mxu0 %v1000
    %1104 = vmatprep.subr.bf16.mxu0 0
    %1105 = vmatpush1.bf16.msra.mxu0 %v1003
    %1106 = vmatprep.subr.bf16.mxu0 0
    %1107 = vmatpush1.bf16.msra.mxu0 %v1006
    %1108 = vmatprep.subr.bf16.mxu0 0
    %1109 = vmatpush1.bf16.msra.mxu0 %v1009
    %1110 = vmatprep.subr.bf16.mxu0 0
    %1111 = vmatpush1.bf16.msra.mxu0 %v1049
    %1112 = vmatprep.subr.bf16.mxu0 0
    %1113 = vmatpush1.bf16.msra.mxu0 0
    %1114 = vmatprep.subr.bf16.mxu0 0
    %1115 = vmatpush1.bf16.msra.mxu0 0
    %1116 = vmatprep.subr.bf16.mxu0 0
    %1117 = vmatpush1.bf16.msra.mxu0 0
    %1118 = vmatprep.subr.bf16.mxu0 0
    %1119 = vmatpush1.bf16.msra.mxu0 0
    %1120 = vmatprep.subr.bf16.mxu0 0
    %1121 = vmatpush1.bf16.msra.mxu0 0
    %1122 = vmatprep.subr.bf16.mxu0 0
    %1123 = vmatpush1.bf16.msra.mxu0 0
    %1124 = vmatprep.subr.bf16.mxu0 0
    %1125 = vmatpush1.bf16.msra.mxu0 0
    %1126 = vmatprep.mubr.bf16.mxu0 %v1039
    %1127 = vmatmul.mubr.bf16.gmra.mrb[0].mxu0 %v848
    %v1128 = vpop.f32.mrb[0].mxu0
    %v1129 = vadd.f32 %v897, %v1128
    %v1130 = vpop.f32.mrb[0].mxu0
    %v1131 = vpop.f32.mrb[0].mxu0
    %v1132 = vadd.f32 %v897, %v1131
    %v1133 = vpop.f32.mrb[0].mxu0
    %1134 = vdwg.mxu0
    %v1135 = vtanh.pop %v1086
    %v1136 = vtanh.pop %v1088
    %v1137 = vtanh.pop %v1129
    %v1138 = vtanh.pop %v1090
    %v1139 = vtanh.pop %v1092
    %v1140 = vtanh.pop %v1132
    %v1141 = vpack.c.bf16 %v1138, %v1135
    %v1142 = vpack.c.bf16 %v1139, %v1136
    %v1143 = vpack.c.bf16 %v1140, %v1137
    %v1144 = vld [vmem:[%s5] sm:$0xf]
    %v1145 = vld [vmem:[%s5 + $0x4] sm:$0xf]
    %v1146 = vld [vmem:[%s5 + $0x8] sm:$0xf]
    %v1147 = vld [vmem:[%s5 + $0xc] sm:$0xf]
    %v1148 = vld [vmem:[%s5 + $0x10] sm:$0xf]
    %v1149 = vld [vmem:[%s5 + $0x14] sm:$0xf]
    %v1150 = vld [vmem:[%s5 + $0x18] sm:$0xf]
    %v1151 = vld [vmem:[%s5 + $0x1c] sm:$0xf]
    %v1152 = vld [vmem:[%s5 + $0x20] sm:$0xf]
    %v1153 = vld [vmem:[%s5 + $0x24] sm:$0xf]
    %v1154 = vld [vmem:[%s5 + $0x28] sm:$0xf]
    %v1155 = vld [vmem:[%s5 + $0x2c] sm:$0xf]
    %v1156 = vld [vmem:[%s5 + $0x30] sm:$0xf]
    %v1157 = vld [vmem:[%s5 + $0x34] sm:$0xf]
    %v1158 = vld [vmem:[%s5 + $0x38] sm:$0xf]
    %v1159 = vld [vmem:[%s5 + $0x3c] sm:$0xf]
    %v1160 = vld [vmem:[%s5 + $0x40] sm:$0xf]
    %v1161 = vld [vmem:[%s5 + $0x44] sm:$0xf]
    %v1162 = vld [vmem:[%s5 + $0x48] sm:$0xf]
    %v1163 = vld [vmem:[%s5 + $0x4c] sm:$0xf]
    %v1164 = vld [vmem:[%s5 + $0x50] sm:$0xf]
    %v1165 = vld [vmem:[%s5 + $0x54] sm:$0xf]
    %v1166 = vld [vmem:[%s5 + $0x58] sm:$0xf]
    %v1167 = vld [vmem:[%s5 + $0x5c] sm:$0xf]
    %v1168 = vld [vmem:[%s5 + $0x60] sm:$0xf]
    %v1169 = vld [vmem:[%s5 + $0x64] sm:$0xf]
    %v1170 = vld [vmem:[%s5 + $0x68] sm:$0xf]
    %v1171 = vld [vmem:[%s5 + $0x6c] sm:$0xf]
    %v1172 = vld [vmem:[%s5 + $0x70] sm:$0xf]
    %v1173 = vld [vmem:[%s5 + $0x74] sm:$0xf]
    %v1174 = vld [vmem:[%s5 + $0x78] sm:$0xf]
    %v1175 = vld [vmem:[%s5 + $0x7c] sm:$0xf]
    %v1176 = vld [vmem:[%s5 + $0x80] sm:$0xf]
    %v1177 = vld [vmem:[%s5 + $0x84] sm:$0xf]
    %v1178 = vld [vmem:[%s5 + $0x88] sm:$0xf]
    %v1214 = vunpack.c.l.b16 %v1144
    %v1215 = vunpack.c.l.b16 %v1145
    %v1216 = vunpack.c.l.b16 %v1146
    %v1217 = vunpack.c.l.b16 %v1147
    %v1218 = vunpack.c.l.b16 %v1148
    %v1219 = vunpack.c.l.b16 %v1149
    %v1220 = vunpack.c.l.b16 %v1150
    %v1221 = vunpack.c.l.b16 %v1151
    %v1222 = vunpack.c.l.b16 %v1152
    %v1223 = vunpack.c.l.b16 %v1153
    %v1224 = vunpack.c.l.b16 %v1154
    %v1225 = vunpack.c.l.b16 %v1155
    %v1226 = vunpack.c.l.b16 %v1156
    %v1227 = vunpack.c.l.b16 %v1157
    %v1228 = vunpack.c.l.b16 %v1158
    %v1229 = vunpack.c.l.b16 %v1159
    %v1230 = vunpack.c.l.b16 %v1160
    %v1231 = vunpack.c.l.b16 %v1161
    %v1232 = vunpack.c.l.b16 %v1162
    %v1233 = vunpack.c.l.b16 %v1163
    %v1234 = vunpack.c.l.b16 %v1164
    %v1235 = vunpack.c.l.b16 %v1165
    %v1236 = vunpack.c.l.b16 %v1166
    %v1237 = vunpack.c.l.b16 %v1167
    %v1238 = vunpack.c.l.b16 %v1168
    %v1239 = vunpack.c.l.b16 %v1169
    %v1240 = vunpack.c.l.b16 %v1170
    %v1241 = vunpack.c.l.b16 %v1171
    %v1242 = vunpack.c.l.b16 %v1172
    %v1243 = vunpack.c.l.b16 %v1173
    %v1244 = vunpack.c.l.b16 %v1174
    %v1245 = vunpack.c.l.b16 %v1175
    %v1246 = vunpack.c.l.b16 %v1176
    %v1247 = vunpack.c.l.b16 %v1177
    %v1248 = vunpack.c.l.b16 %v1178
    %v1249 = vpack.c.b16 %v1215, %v1214
    %v1250 = vpack.c.b16 %v1217, %v1216
    %v1251 = vpack.c.b16 %v1219, %v1218
    %v1252 = vpack.c.b16 %v1221, %v1220
    %v1253 = vpack.c.b16 %v1223, %v1222
    %v1254 = vpack.c.b16 %v1225, %v1224
    %v1255 = vpack.c.b16 %v1227, %v1226
    %v1256 = vpack.c.b16 %v1229, %v1228
    %v1257 = vpack.c.b16 %v1231, %v1230
    %v1258 = vpack.c.b16 %v1233, %v1232
    %v1259 = vpack.c.b16 %v1235, %v1234
    %v1260 = vpack.c.b16 %v1237, %v1236
    %v1261 = vpack.c.b16 %v1239, %v1238
    %v1262 = vpack.c.b16 %v1241, %v1240
    %v1263 = vpack.c.b16 %v1243, %v1242
    %v1264 = vpack.c.b16 %v1245, %v1244
    %v1265 = vpack.c.b16 %v1247, %v1246
    %v1266 = vpack.c.b16 %v1248, %v1248
    %vm1284 = vcmask 195584
    %v1286 = vsel %vm1284, %v1143, 0
    %vm1288 = vcmask 1043456
    %v1290 = vsel %vm1288, %v1266, 0
    %1292 = vmatprep.subr.bf16.mxu0 0
    %1293 = vmatpush1.bf16.msra.mxu0 %v1249
    %1294 = vmatprep.subr.bf16.mxu0 0
    %1295 = vmatpush1.bf16.msra.mxu0 %v1250
    %1296 = vmatprep.subr.bf16.mxu0 0
    %1297 = vmatpush1.bf16.msra.mxu0 %v1251
    %1298 = vmatprep.subr.bf16.mxu0 0
    %1299 = vmatpush1.bf16.msra.mxu0 %v1252
    %1300 = vmatprep.subr.bf16.mxu0 0
    %1301 = vmatpush1.bf16.msra.mxu0 %v1253
    %1302 = vmatprep.subr.bf16.mxu0 0
    %1303 = vmatpush1.bf16.msra.mxu0 %v1254
    %1304 = vmatprep.subr.bf16.mxu0 0
    %1305 = vmatpush1.bf16.msra.mxu0 %v1255
    %1306 = vmatprep.subr.bf16.mxu0 0
    %1307 = vmatpush1.bf16.msra.mxu0 %v1256
    %1308 = vmatprep.subr.bf16.mxu0 0
    %1309 = vmatpush1.bf16.msra.mxu0 %v1257
    %1310 = vmatprep.subr.bf16.mxu0 0
    %1311 = vmatpush1.bf16.msra.mxu0 %v1258
    %1312 = vmatprep.subr.bf16.mxu0 0
    %1313 = vmatpush1.bf16.msra.mxu0 %v1259
    %1314 = vmatprep.subr.bf16.mxu0 0
    %1315 = vmatpush1.bf16.msra.mxu0 %v1260
    %1316 = vmatprep.subr.bf16.mxu0 0
    %1317 = vmatpush1.bf16.msra.mxu0 %v1261
    %1318 = vmatprep.subr.bf16.mxu0 0
    %1319 = vmatpush1.bf16.msra.mxu0 %v1262
    %1320 = vmatprep.subr.bf16.mxu0 0
    %1321 = vmatpush1.bf16.msra.mxu0 %v1263
    %1322 = vmatprep.subr.bf16.mxu0 0
    %1323 = vmatpush1.bf16.msra.mxu0 %v1264
    %1324 = vmatprep.mubr.bf16.mxu0 %v1142
    %1325 = vmatmul.mubr.bf16.gmra.mrb[0].mxu0 %v1141
    %v1326 = vpop.f32.mrb[0].mxu0
    %v1327 = vadd.f32 0.0, %v1326
    %v1328 = vpop.f32.mrb[0].mxu0
    %v1329 = vpop.f32.mrb[0].mxu0
    %v1330 = vadd.f32 0.0, %v1329
    %v1331 = vpop.f32.mrb[0].mxu0
    %1332 = vdwg.mxu0
    %1333 = vmatprep.subr.bf16.mxu0 0
    %1334 = vmatpush1.bf16.msra.mxu0 %v1265
    %1335 = vmatprep.subr.bf16.mxu0 0
    %1336 = vmatpush1.bf16.msra.mxu0 %v1290
    %1337 = vmatprep.subr.bf16.mxu0 0
    %1338 = vmatpush1.bf16.msra.mxu0 0
    %1339 = vmatprep.subr.bf16.mxu0 0
    %1340 = vmatpush1.bf16.msra.mxu0 0
    %1341 = vmatprep.subr.bf16.mxu0 0
    %1342 = vmatpush1.bf16.msra.mxu0 0
    %1343 = vmatprep.subr.bf16.mxu0 0
    %1344 = vmatpush1.bf16.msra.mxu0 0
    %1345 = vmatprep.subr.bf16.mxu0 0
    %1346 = vmatpush1.bf16.msra.mxu0 0
    %1347 = vmatprep.subr.bf16.mxu0 0
    %1348 = vmatpush1.bf16.msra.mxu0 0
    %1349 = vmatprep.subr.bf16.mxu0 0
    %1350 = vmatpush1.bf16.msra.mxu0 0
    %1351 = vmatprep.subr.bf16.mxu0 0
    %1352 = vmatpush1.bf16.msra.mxu0 0
    %1353 = vmatprep.subr.bf16.mxu0 0
    %1354 = vmatpush1.bf16.msra.mxu0 0
    %1355 = vmatprep.subr.bf16.mxu0 0
    %1356 = vmatpush1.bf16.msra.mxu0 0
    %1357 = vmatprep.subr.bf16.mxu0 0
    %1358 = vmatpush1.bf16.msra.mxu0 0
    %1359 = vmatprep.subr.bf16.mxu0 0
    %1360 = vmatpush1.bf16.msra.mxu0 0
    %1361 = vmatprep.subr.bf16.mxu0 0
    %1362 = vmatpush1.bf16.msra.mxu0 0
    %1363 = vmatprep.subr.bf16.mxu0 0
    %1364 = vmatpush1.bf16.msra.mxu0 0
    %1365 = vmatprep.mubr.bf16.mxu0 0
    %1366 = vmatmul.mubr.bf16.gmra.mrb[0].mxu0 %v1286
    %v1367 = vpop.f32.mrb[0].mxu0
    %v1368 = vadd.f32 %v1327, %v1367
    %v1369 = vpop.f32.mrb[0].mxu0
    %v1370 = vpop.f32.mrb[0].mxu0
    %v1371 = vadd.f32 %v1330, %v1370
    %v1372 = vpop.f32.mrb[0].mxu0
    %1373 = vdwg.mxu0
    %v1374 = vlaneseq
    %v1375 = vand.u32 %v1374, 127
    %vm1376 = vcmp.lt.s32.totalorder %v1375, 10
    %v1377 = vsel %vm1376, %v1368, -inf
    %v1378 = vsel %vm1376, %v1371, -inf
    %1379 = vmax.xlane.f32.xlu0 %v1377
    %v1380 = vpop.xlane.xlu0 %1379
    %1381 = vmax.xlane.f32.xlu0 %v1378
    %v1382 = vpop.xlane.xlu0 %1381
    %v1383 = vsub.f32 %v1377, %v1380
    %v1384 = vsub.f32 %v1378, %v1382
    %v1385 = vmul.f32 %v1383, 1.442695
    %v1386 = vpow.pop %v1385
    %v1387 = vmul.f32 %v1384, 1.442695
    %v1388 = vpow.pop %v1387
    %v1389 = vsel %vm1376, %v1386, 0.0
    %v1390 = vsel %vm1376, %v1388, 0.0
    %1391 = vadd.xlane.f32.xlu0 %v1389
    %v1392 = vpop.xlane.xlu0 %1391
    %1393 = vadd.xlane.f32.xlu0 %v1390
    %v1394 = vpop.xlane.xlu0 %1393
    %v1395 = vlog2.pop %v1392
    %v1396 = vmul.f32 %v1395, 0.6931472
    %v1397 = vlog2.pop %v1394
    %v1398 = vmul.f32 %v1397, 0.6931472
    %v1399 = vsub.f32 %v1383, %v1396
    %v1400 = vsub.f32 %v1384, %v1398
    %v1401 = vsel %vm1376, %v1399, 0.0
    %v1402 = vsel %vm1376, %v1400, 0.0
    %1403 = vst [vmem:[#allocation2] sm:$0xff] %v1401
    %1404 = vst [vmem:[#allocation2 + $0x8] sm:$0xff] %v1402
    // Predicated region
    $region26: #{tpu_custom_call.1} parent=1 // pred_check
      _
    $region27: #{tpu_custom_call.1} parent=1 // pred_check_branch
      %1406 = sbr.rel (0) target = $region29
    $region28: #{tpu_custom_call.1} parent=1 // pred_region
      %s1408 = ssub.s32 256, 256
      %1409 = vsyncadd [#allocation3], %s1408
      %s1410 = sshll.u32 [#allocation2], 4
      %s1411 = int_to_ptr.vmem [resolvable:$true] %s1410
      %1416 = dma.vmem_to_hbm [thread:$0]  %s1411, 256, %s6, [#allocation3], 128, 128, 8
    $region29: #{tpu_custom_call.1} parent=1 // pred_fallthru
      _
    // Predicated region
    $region30: #{tpu_custom_call.1} parent=1 // pred_check
      _
    $region31: #{tpu_custom_call.1} parent=1 // pred_check_branch
      %1418 = sbr.rel (0) target = $region33
    $region32: #{tpu_custom_call.1} parent=1 // pred_region
      %1419 = dma.done [#allocation3], 256
    $region33: #{tpu_custom_call.1} parent=1 // pred_fallthru
      _
    %1420 = vsyncpa [#allocation3], 1

</llo_original>
